<compile_context>
chip_gen: v5e
topology: v5e:2x2
jax: 0.10.0
libtpu: 0.0.40
codegen_flags: <defaults>
</compile_context>

<pallas_src>
import functools
import math

import jax
import jax.numpy as jnp
from jax.experimental import pallas as pl
from jax.experimental.pallas import tpu as pltpu

EPS = 1e-5                 # BatchNorm2d default eps
_MM_DTYPE = jnp.bfloat16   # MXU operand dtype (accumulation is always f32)
_TARGET_ROWS = 512         # target M for the fc1/fc2 matmuls


# ---------------------------------------------------------------------------
# small helpers
# ---------------------------------------------------------------------------
@functools.lru_cache(maxsize=None)
def _single_buffer_supported():
    """True if BlockSpec(pipeline_mode=pl.Buffered(1)) lowers on this backend.

    Single-buffering grid-invariant (resident) operands halves their VMEM
    footprint (matters most on v7x's 64 MiB VMEM and v5e's small scoped
    default).  Probed once with a tiny kernel so older Pallas versions fall
    back to the default double buffering instead of failing.
    """
    try:
        res_spec = pl.BlockSpec((8, 128), lambda i: (0, 0),
                                pipeline_mode=pl.Buffered(1))
    except TypeError:                      # pipeline_mode kwarg not available
        return False

    def _probe(a_ref, b_ref, o_ref):
        o_ref[...] = a_ref[...] + b_ref[...]

    try:
        a = jnp.ones((16, 128), jnp.float32)
        b = jnp.full((8, 128), 2.0, jnp.float32)
        out = pl.pallas_call(
            _probe,
            out_shape=jax.ShapeDtypeStruct((16, 128), jnp.float32),
            grid=(2,),
            in_specs=[pl.BlockSpec((8, 128), lambda i: (i, 0)), res_spec],
            out_specs=pl.BlockSpec((8, 128), lambda i: (i, 0)),
        )(a, b)
        jax.block_until_ready(out)
        return bool(jnp.all(out == 3.0))
    except Exception:                      # unsupported buffer_count / lowering
        return False


def _maybe_single_buffered(block_shape, index_map):
    if _single_buffer_supported():
        return pl.BlockSpec(block_shape, index_map, pipeline_mode=pl.Buffered(1))
    return pl.BlockSpec(block_shape, index_map)


def _resident_spec(shape):
    """BlockSpec for an operand kept fully resident in VMEM: the block index is
    constant across the grid so it is DMA'd once and reused every step."""
    zeros = (0,) * len(shape)
    return _maybe_single_buffered(shape, lambda *_: zeros)


def _pick_row_block(R, W, target=_TARGET_ROWS):
    """Largest divisor r of R with r*W <= target (always >= 1)."""
    best = 1
    for r in range(1, R + 1):
        if R % r == 0 and r * W <= target:
            best = r
    return best


def _pick_tiles(N, H, W, target_rows=_TARGET_ROWS):
    """Pick (G images per grid step, tH rows per step) so the fc1/fc2 matmul
    M = G*tH*W lands near target_rows: >=256 keeps the 256-wide v6e/v7x MXU
    (and the 128-wide v5e MXU) busy at the low-resolution stages."""
    if H * W >= target_rows:
        return 1, _pick_row_block(H, W, target_rows)
    G = 1
    for g in range(1, N + 1):
        if N % g == 0 and g * H * W <= target_rows:
            G = g
    return G, H


@functools.lru_cache(maxsize=None)
def _vmem_cap_bytes():
    try:
        cap = pltpu.get_tpu_info().vmem_capacity_bytes
    except Exception:
        cap = 64 * 2 ** 20            # v7x physical; v5e/v6e have 128 MiB
    return max(cap - 4 * 2 ** 20, 24 * 2 ** 20)   # headroom for internal scratch


def _vmem_limit(budget_bytes):
    """Explicit scoped-VMEM limit from the real working set; the defaults
    (~16 MiB on v5e, ~32 MiB on v6e/v7x) can reject valid tilings at large C."""
    return int(min(_vmem_cap_bytes(), max(32 * 2 ** 20, int(1.5 * budget_bytes))))


_SQRT_HALF = 1.0 / math.sqrt(2.0)


def _recip_exact(v):
    return 1.0 / v


def _recip_eup(v):
    # divide -> EUP approximate reciprocal (free slot next to the MXU matmuls);
    # adds ~1e-4 error to erf, far inside the bf16-matmul tolerance.
    return pl.reciprocal(v, approx=True)


def _erf_poly(x, recip):
    # Abramowitz & Stegun 7.1.26 polynomial, |err| < 1.5e-7 vs true erf.
    a1, a2, a3, a4, a5 = 0.254829592, -0.284496736, 1.421413741, -1.453152027, 1.061405429
    p = 0.3275911
    ax = jnp.abs(x)
    t = recip(1.0 + p * ax)
    poly = ((((a5 * t + a4) * t + a3) * t + a2) * t + a1) * t
    e = 1.0 - poly * jnp.exp(-ax * ax)
    return jnp.where(x >= 0.0, e, -e)


def _gelu(x, recip):
    # matches torch.nn.GELU() (approximate='none')
    return 0.5 * x * (1.0 + _erf_poly(x * _SQRT_HALF, recip))


# ---------------------------------------------------------------------------
# Downsample: BN(in_chs) folded into the conv weights; 2x2/stride-2 conv as a
# row-tiled patch matmul.  Patch assembly (lane concat) + bf16 cast happen in
# VMEM, so the patch matrix never round-trips through HBM.
# ---------------------------------------------------------------------------
def _downsample_kernel(x_ref, w_ref, b_ref, o_ref, *, ds, mm_dtype):
    tR, Wo, Cout = o_ref.shape
    x = x_ref[...]                                        # (tR, ds, Wo, ds*Cin)
    parts = [x[:, kh] for kh in range(ds)]                # each (tR, Wo, ds*Cin)
    patches = jnp.concatenate(parts, axis=-1).astype(mm_dtype)   # (tR, Wo, ds*ds*Cin)
    K = patches.shape[-1]
    acc = jnp.dot(patches.reshape(tR * Wo, K), w_ref[...],
                  preferred_element_type=jnp.float32)
    o_ref[...] = (acc + b_ref[...]).reshape(tR, Wo, Cout).astype(o_ref.dtype)


def downsample(x_nhwc, p, *, matmul_dtype=_MM_DTYPE):
    N, H, W, Cin = x_nhwc.shape
    ds = p['stride']
    if ds <= 1:                        # nn.Identity() path of the module
        return x_nhwc
    Cout = p['w'].shape[-1]
    # TODO(synk): PyTorch Conv2d floor semantics for H,W not divisible by the
    # stride are not reproduced; guard explicitly instead of mis-reshaping.
    assert H % ds == 0 and W % ds == 0, "downsample needs H, W divisible by stride"
    Ho, Wo = H // ds, W // ds

    # Fold BN (per input channel) into the conv weight/bias:
    #   conv(BN(x)) = x @ (scale*w) + (b + shift @ w)
    scale = p['bn_gamma'] / jnp.sqrt(p['bn_var'] + EPS)
    shift = p['bn_beta'] - p['bn_mean'] * scale
    w3 = p['w'].reshape(ds * ds, Cin, Cout)                    # rows ordered (kh, kw, cin)
    w_fold = (w3 * scale[None, :, None]).reshape(ds * ds * Cin, Cout).astype(matmul_dtype)
    b_fold = (p['b'] + jnp.einsum('kio,i->o', w3, shift))[None, :]

    # Free row-major view: (N, H, W, Cin) -> (N*Ho, ds, Wo, ds*Cin).
    xv = x_nhwc.reshape(N * Ho, ds, Wo, ds * Cin)
    R = N * Ho
    tR = _pick_row_block(R, Wo)            # M = tR*Wo rows per matmul, bounded
    grid = (R // tR,)

    K = ds * ds * Cin
    Mrows = tR * Wo
    budget = (2 * Mrows * K * 4            # double-buffered input blocks
              + 2 * K * Cout * 2           # resident weights (<=2 bufs, bf16)
              + 2 * Mrows * Cout * 4       # double-buffered output blocks
              + Mrows * K * (4 + 2)        # in-kernel patch temporaries
              + Mrows * Cout * 4)          # accumulator

    kern = functools.partial(_downsample_kernel, ds=ds, mm_dtype=matmul_dtype)
    out = pl.pallas_call(
        kern,
        out_shape=jax.ShapeDtypeStruct((R, Wo, Cout), jnp.float32),
        grid=grid,
        in_specs=[pl.BlockSpec((tR, ds, Wo, ds * Cin), lambda i: (i, 0, 0, 0)),
                  _resident_spec(w_fold.shape),
                  _resident_spec(b_fold.shape)],
        out_specs=pl.BlockSpec((tR, Wo, Cout), lambda i: (i, 0, 0)),
        compiler_params=pltpu.CompilerParams(
            dimension_semantics=("parallel",),
            vmem_limit_bytes=_vmem_limit(budget)),
    )(xv, w_fold, b_fold)
    return out.reshape(N, Ho, Wo, Cout)


# ---------------------------------------------------------------------------
# MetaNeXtBlock: InceptionDWConv2d + BN + ConvMlp + layer scale + residual,
# fused into one Pallas kernel, tiled over (image-group, row-tile).
#   - G whole padded images (or one image with H-tiling) resident in VMEM
#   - BN affine + depthwise biases pre-folded into fc1 (w1f / b1f)
#   - fc1/fc2 are single K=C / K=4C bf16 matmuls with M = G*tH*W rows
# ---------------------------------------------------------------------------
def _block_kernel(xpad_ref, whw_ref, ww_ref, wh_ref,
                  w1_ref, b1_ref, w2_ref, b2_ref, g_ref,
                  o_ref, *, idc, gc, sq, band, padT, padL, tH, mm_dtype):
    G, _, W, C = o_ref.shape
    sp, bw = sq // 2, band // 2
    h0 = pl.multiple_of(pl.program_id(1) * tH, tH)        # first output row of this tile
    M = G * tH * W

    # --- unpadded rows (identity channels + residual shortcut) --------------
    x_c = xpad_ref[:, pl.ds(h0 + padT, tH), pl.ds(padL, W), :]            # (G,tH,W,C)

    # --- InceptionDWConv2d token mixer (biases folded into b1) --------------
    whw = whw_ref[...]
    win_hw = xpad_ref[:, pl.ds(h0 + padT - sp, tH + 2 * sp),
                      pl.ds(padL - sp, W + 2 * sp), idc:idc + gc]
    y_hw = None
    for di in range(sq):
        for dj in range(sq):
            k = di * sq + dj
            t = win_hw[:, di:di + tH, dj:dj + W, :] * whw[k:k + 1, :]
            y_hw = t if y_hw is None else y_hw + t

    ww = ww_ref[...]
    win_w = xpad_ref[:, pl.ds(h0 + padT, tH),
                     pl.ds(padL - bw, W + 2 * bw), idc + gc:idc + 2 * gc]
    y_w = None
    for dj in range(band):
        t = win_w[:, :, dj:dj + W, :] * ww[dj:dj + 1, :]
        y_w = t if y_w is None else y_w + t

    wh = wh_ref[...]
    win_h = xpad_ref[:, pl.ds(h0 + padT - bw, tH + 2 * bw),
                     pl.ds(padL, W), idc + 2 * gc:idc + 3 * gc]
    y_h = None
    for di in range(band):
        t = win_h[:, di:di + tH, :, :] * wh[di:di + 1, :]
        y_h = t if y_h is None else y_h + t

    # --- ConvMlp: one lane-dense K=C matmul on the concatenated mixer -------
    # branches are cast to bf16 BEFORE the concat (halves shuffle/VMEM traffic)
    parts = []
    if idc > 0:
        parts.append(x_c[..., :idc].astype(mm_dtype).reshape(M, idc))
    parts += [y_hw.astype(mm_dtype).reshape(M, gc),
              y_w.astype(mm_dtype).reshape(M, gc),
              y_h.astype(mm_dtype).reshape(M, gc)]
    mix = jnp.concatenate(parts, axis=1)                                   # (M, C)

    h1 = jnp.dot(mix, w1_ref[...], preferred_element_type=jnp.float32) + b1_ref[...]
    h1 = _gelu(h1, _recip_eup)          # f32 GELU (safe on v5e); EUP reciprocal
    h2 = jnp.dot(h1.astype(mm_dtype), w2_ref[...],
                 preferred_element_type=jnp.float32) + b2_ref[...]

    # --- layer scale + residual ----------------------------------------------
    o_ref[...] = (h2.reshape(G, tH, W, C) * g_ref[...] + x_c).astype(o_ref.dtype)


def metanext_block(x_nhwc, p, *, square_kernel_size=3, band_kernel_size=11,
                   matmul_dtype=_MM_DTYPE):
    N, H, W, C = x_nhwc.shape
    gc = p['gc']
    idc = C - 3 * gc
    sq, band = square_kernel_size, band_kernel_size
    sp, bw = sq // 2, band // 2
    padT = bw                              # row halo (covers both band and hw branches)
    padL = -(-bw // 8) * 8                 # column halo rounded up to the 8-sublane
    padR = bw                              #   boundary -> aligned base window reads
    assert padT >= sp and padL >= bw

    # Single zero-padded copy of x serves every branch.
    xpad = jnp.pad(x_nhwc, ((0, 0), (padT, padT), (padL, padR), (0, 0)))
    Hp, Wp = H + 2 * padT, W + padL + padR

    # Fold BN (inference affine) + depthwise biases into fc1:
    #   fc1(BN(mix + b_dw)) = mix @ (scale*w1) + (b1 + (shift + scale*b_dw) @ w1)
    scale = p['bn_gamma'] / jnp.sqrt(p['bn_var'] + EPS)
    shift = p['bn_beta'] - p['bn_mean'] * scale
    b_dw = jnp.concatenate([jnp.zeros((idc,), jnp.float32), p['b_hw'], p['b_w'], p['b_h']])
    w1f = (scale[:, None] * p['w1']).astype(matmul_dtype)
    b1f = (p['b1'] + (shift + scale * b_dw) @ p['w1'])[None, :]
    w2c = p['w2'].astype(matmul_dtype)
    b2r = p['b2'][None, :]
    gammar = p['gamma'][None, :]
    hidden = w1f.shape[1]

    G, tH = _pick_tiles(N, H, W)           # fc matmul M = G*tH*W rows
    grid = (N // G, H // tH)

    nres = 1 if _single_buffer_supported() else 2
    M = G * tH * W
    budget = (nres * G * Hp * Wp * C * 4                      # resident padded image(s)
              + nres * 2 * C * hidden * 2                     # w1f + w2 (bf16)
              + 2 * G * tH * W * C * 4                        # pipelined output blocks
              + M * C * (4 * 4 + 2)                           # x_c / y_* / h2 / mix temps
              + M * hidden * (4 + 2)                          # h1 f32 + bf16 copy
              + 3 * G * (tH + 2 * bw) * Wp * max(gc, 1) * 4)  # mixer window loads

    kern = functools.partial(_block_kernel, idc=idc, gc=gc, sq=sq, band=band,
                             padT=padT, padL=padL, tH=tH, mm_dtype=matmul_dtype)
    in_specs = [
        _maybe_single_buffered((G, Hp, Wp, C), lambda n, h: (n, 0, 0, 0)),
        _resident_spec(p['w_hw'].shape),
        _resident_spec(p['w_w'].shape),
        _resident_spec(p['w_h'].shape),
        _resident_spec(w1f.shape),
        _resident_spec(b1f.shape),
        _resident_spec(w2c.shape),
        _resident_spec(b2r.shape),
        _resident_spec(gammar.shape),
    ]
    # TODO(synk): optional v6e/v7x-only bf16 GELU / bf16 residual stream left
    # out to keep the accuracy margin; enable after per-chip validation.
    return pl.pallas_call(
        kern,
        out_shape=jax.ShapeDtypeStruct((N, H, W, C), jnp.float32),
        grid=grid,
        in_specs=in_specs,
        out_specs=pl.BlockSpec((G, tH, W, C), lambda n, h: (n, h, 0, 0)),
        compiler_params=pltpu.CompilerParams(
            dimension_semantics=("parallel", "parallel"),   # row tiles independent
            vmem_limit_bytes=_vmem_limit(budget)),
    )(xpad, p['w_hw'], p['w_w'], p['w_h'], w1f, b1f, w2c, b2r, gammar)


def metanext_stage(x_nchw, params, *, matmul_dtype=_MM_DTYPE):
    x = jnp.transpose(x_nchw, (0, 2, 3, 1)).astype(jnp.float32)   # NCHW -> NHWC
    x = downsample(x, params['downsample'], matmul_dtype=matmul_dtype)
    for bp in params['blocks']:
        x = metanext_block(x, bp, matmul_dtype=matmul_dtype)
    return jnp.transpose(x, (0, 3, 1, 2))                         # NHWC -> NCHW


# ---------------------------------------------------------------------------
# pure-JAX (f32) reference of the same forward pass, used for validation
# ---------------------------------------------------------------------------
def _reference_block(x, p, sq=3, band=11):
    N, H, W, C = x.shape
    gc = p['gc']
    idc = C - 3 * gc
    sp, bw = sq // 2, band // 2
    x_hw = x[..., idc:idc + gc]
    x_w = x[..., idc + gc:idc + 2 * gc]
    x_h = x[..., idc + 2 * gc:]
    xhw = jnp.pad(x_hw, ((0, 0), (sp, sp), (sp, sp), (0, 0)))
    xw = jnp.pad(x_w, ((0, 0), (0, 0), (bw, bw), (0, 0)))
    xh = jnp.pad(x_h, ((0, 0), (bw, bw), (0, 0), (0, 0)))
    y_hw = sum(xhw[:, i:i + H, j:j + W, :] * p['w_hw'][i * sq + j]
               for i in range(sq) for j in range(sq)) + p['b_hw']
    y_w = sum(xw[:, :, j:j + W, :] * p['w_w'][j] for j in range(band)) + p['b_w']
    y_h = sum(xh[:, i:i + H, :, :] * p['w_h'][i] for i in range(band)) + p['b_h']
    y = jnp.concatenate([x[..., :idc], y_hw, y_w, y_h], axis=-1)
    scale = p['bn_gamma'] / jnp.sqrt(p['bn_var'] + EPS)
    shift = p['bn_beta'] - p['bn_mean'] * scale
    y = y * scale + shift
    h1 = _gelu(y.reshape(-1, C) @ p['w1'] + p['b1'], _recip_exact)
    h2 = h1 @ p['w2'] + p['b2']
    return h2.reshape(N, H, W, C) * p['gamma'] + x


def reference_stage(x_nchw, params):
    x = jnp.transpose(x_nchw, (0, 2, 3, 1)).astype(jnp.float32)
    dp = params['downsample']
    if dp['stride'] > 1:
        N, H, W, Cin = x.shape
        ds = dp['stride']
        Ho, Wo = H // ds, W // ds
        scale = dp['bn_gamma'] / jnp.sqrt(dp['bn_var'] + EPS)
        shift = dp['bn_beta'] - dp['bn_mean'] * scale
        xb = x * scale + shift
        patches = xb.reshape(N, Ho, ds, Wo, ds, Cin).transpose(0, 1, 3, 2, 4, 5)
        patches = patches.reshape(N * Ho * Wo, ds * ds * Cin)
        x = (patches @ dp['w'] + dp['b']).reshape(N, Ho, Wo, -1)
    for bp in params['blocks']:
        x = _reference_block(x, bp)
    return jnp.transpose(x, (0, 3, 1, 2))


# ---------------------------------------------------------------------------
# deterministic synthetic parameter init (shapes follow the nn.Module __init__)
# ---------------------------------------------------------------------------
def init_params(key, in_chs, out_chs, *, ds_stride=2, depth=1, mlp_ratio=4,
                square_kernel_size=3, band_kernel_size=11, branch_ratio=0.125,
                ls_init_value=1.0):
    keys = jax.random.split(key, 1 + depth)
    kd = jax.random.split(keys[0], 6)
    params = {
        'downsample': dict(
            stride=ds_stride,
            bn_gamma=jax.random.uniform(kd[0], (in_chs,), jnp.float32, 0.8, 1.2),
            bn_beta=0.1 * jax.random.normal(kd[1], (in_chs,), jnp.float32),
            bn_mean=0.1 * jax.random.normal(kd[2], (in_chs,), jnp.float32),
            bn_var=jax.random.uniform(kd[3], (in_chs,), jnp.float32, 0.5, 1.5),
            # conv weight stored HWIO-flattened: row index = (kh*ds + kw)*Cin + cin
            w=0.1 * jax.random.normal(kd[4], (ds_stride * ds_stride * in_chs, out_chs), jnp.float32),
            b=0.1 * jax.random.normal(kd[5], (out_chs,), jnp.float32),
        ),
        'blocks': [],
    }
    gc = int(out_chs * branch_ratio)
    hidden = int(mlp_ratio * out_chs)
    for d in range(depth):
        kb = jax.random.split(keys[1 + d], 14)
        params['blocks'].append(dict(
            gc=gc,
            w_hw=0.2 * jax.random.normal(kb[0], (square_kernel_size * square_kernel_size, gc), jnp.float32),
            b_hw=0.1 * jax.random.normal(kb[1], (gc,), jnp.float32),
            w_w=0.2 * jax.random.normal(kb[2], (band_kernel_size, gc), jnp.float32),
            b_w=0.1 * jax.random.normal(kb[3], (gc,), jnp.float32),
            w_h=0.2 * jax.random.normal(kb[4], (band_kernel_size, gc), jnp.float32),
            b_h=0.1 * jax.random.normal(kb[5], (gc,), jnp.float32),
            bn_gamma=jax.random.uniform(kb[6], (out_chs,), jnp.float32, 0.8, 1.2),
            bn_beta=0.1 * jax.random.normal(kb[7], (out_chs,), jnp.float32),
            bn_mean=0.1 * jax.random.normal(kb[8], (out_chs,), jnp.float32),
            bn_var=jax.random.uniform(kb[9], (out_chs,), jnp.float32, 0.5, 1.5),
            w1=0.1 * jax.random.normal(kb[10], (out_chs, hidden), jnp.float32),
            b1=0.1 * jax.random.normal(kb[11], (hidden,), jnp.float32),
            w2=0.1 * jax.random.normal(kb[12], (hidden, out_chs), jnp.float32),
            b2=0.1 * jax.random.normal(kb[13], (out_chs,), jnp.float32),
            gamma=ls_init_value * jnp.ones((out_chs,), jnp.float32),
        ))
    return params


if __name__ == "__main__":
    key = jax.random.PRNGKey(0)
    kx, kp = jax.random.split(key)

    N, in_chs, H, W = 2, 8, 16, 16
    out_chs, depth = 16, 2

    # PyTorch-convention NCHW input
    x = jax.random.normal(kx, (N, in_chs, H, W), jnp.float32)
    params = init_params(kp, in_chs, out_chs, ds_stride=2, depth=depth,
                         mlp_ratio=4, ls_init_value=1.0)

    y = jax.block_until_ready(metanext_stage(x, params))       # bf16 matmuls, f32 accum
    y_ref = jax.block_until_ready(reference_stage(x, params))  # pure f32 reference

    assert y.shape == (N, out_chs, H // 2, W // 2), y.shape
    assert bool(jnp.all(jnp.isfinite(y)))
    max_err = float(jnp.max(jnp.abs(y - y_ref)))
    assert max_err < 5e-2, f"mismatch vs f32 reference: max abs err = {max_err}"
    print("KERNEL_OK")
</pallas_src>

<mosaic_0001>
module attributes {stable_mosaic.version = 11 : i64} {
  func.func @_probe(%arg0: i32, %arg1: memref<8x128xf32, #tpu.memory_space<vmem>>, %arg2: memref<8x128xf32, #tpu.memory_space<vmem>>, %arg3: memref<8x128xf32, #tpu.memory_space<vmem>>) attributes {dimension_semantics = [#tpu.dimension_semantics<arbitrary>], iteration_bounds = array<i64: 2>, scalar_prefetch = 0 : i64, scratch_operands = 0 : i64, tpu.core_type = #tpu.core_type<tc>, window_params = [{transform_indices = @transform_0, window_bounds = array<i64: 8, 128>}, {pipeline_mode = #tpu.pipeline_mode<synchronous>, transform_indices = @transform_1, window_bounds = array<i64: 8, 128>}, {transform_indices = @transform_2, window_bounds = array<i64: 8, 128>}]} {
    %c0 = arith.constant 0 : index
    %c0_0 = arith.constant 0 : index
    %0 = vector.load %arg1[%c0, %c0_0] : memref<8x128xf32, #tpu.memory_space<vmem>>, vector<8x128xf32>
    %c0_1 = arith.constant 0 : index
    %c0_2 = arith.constant 0 : index
    %1 = vector.load %arg2[%c0_1, %c0_2] : memref<8x128xf32, #tpu.memory_space<vmem>>, vector<8x128xf32>
    %2 = arith.addf %0, %1 : vector<8x128xf32>
    %c0_3 = arith.constant 0 : index
    %c0_4 = arith.constant 0 : index
    %3 = vector.load %arg3[%c0_3, %c0_4] : memref<8x128xf32, #tpu.memory_space<vmem>>, vector<8x128xf32>
    tpu.vector_store %arg3[%c0_3, %c0_4], %2 {strides = array<i32>} : memref<8x128xf32, #tpu.memory_space<vmem>>, vector<8x128xf32>,
    return
  }
  func.func @transform_0(%arg0: i32) -> (i32, i32) {
    %c0_i32 = arith.constant 0 : i32
    %c0_i32_0 = arith.constant 0 : i32
    return %arg0, %c0_i32 : i32, i32
  }
  func.func @transform_1(%arg0: i32) -> (i32, i32) {
    %c0_i32 = arith.constant 0 : i32
    %c0_i32_0 = arith.constant 0 : i32
    %c0_i32_1 = arith.constant 0 : i32
    return %c0_i32, %c0_i32_0 : i32, i32
  }
  func.func @transform_2(%arg0: i32) -> (i32, i32) {
    %c0_i32 = arith.constant 0 : i32
    %c0_i32_0 = arith.constant 0 : i32
    return %arg0, %c0_i32 : i32, i32
  }
}

module attributes {stable_mosaic.version = 11 : i64} {
  func.func @_downsample_kernel(%arg0: i32, %arg1: memref<16x2x8x16xf32, #tpu.memory_space<vmem>>, %arg2: memref<32x16xbf16, #tpu.memory_space<vmem>>, %arg3: memref<1x16xf32, #tpu.memory_space<vmem>>, %arg4: memref<16x8x16xf32, #tpu.memory_space<vmem>>) attributes {dimension_semantics = [#tpu.dimension_semantics<parallel>], iteration_bounds = array<i64: 1>, scalar_prefetch = 0 : i64, scratch_operands = 0 : i64, tpu.core_type = #tpu.core_type<tc>, window_params = [{transform_indices = @transform_0, window_bounds = array<i64: 16, 2, 8, 16>}, {pipeline_mode = #tpu.pipeline_mode<synchronous>, transform_indices = @transform_1, window_bounds = array<i64: 32, 16>}, {pipeline_mode = #tpu.pipeline_mode<synchronous>, transform_indices = @transform_2, window_bounds = array<i64: 1, 16>}, {transform_indices = @transform_3, window_bounds = array<i64: 16, 8, 16>}]} {
    %c0 = arith.constant 0 : index
    %c0_0 = arith.constant 0 : index
    %c0_1 = arith.constant 0 : index
    %c0_2 = arith.constant 0 : index
    %0 = vector.load %arg1[%c0, %c0_0, %c0_1, %c0_2] : memref<16x2x8x16xf32, #tpu.memory_space<vmem>>, vector<16x2x8x16xf32>
    %1 = vector.extract_strided_slice %0 {offsets = [0, 0, 0, 0], sizes = [16, 1, 8, 16], strides = [1, 1, 1, 1]} : vector<16x2x8x16xf32> to vector<16x1x8x16xf32>
    %2 = vector.shape_cast %1 : vector<16x1x8x16xf32> to vector<16x8x16xf32>
    %3 = vector.extract_strided_slice %0 {offsets = [0, 1, 0, 0], sizes = [16, 1, 8, 16], strides = [1, 1, 1, 1]} : vector<16x2x8x16xf32> to vector<16x1x8x16xf32>
    %4 = vector.shape_cast %3 : vector<16x1x8x16xf32> to vector<16x8x16xf32>
    %5 = tpu.concatenate %2, %4 in 2 : vector<16x8x16xf32>, vector<16x8x16xf32> -> vector<16x8x32xf32>
    %6 = arith.truncf %5 : vector<16x8x32xf32> to vector<16x8x32xbf16>
    %7 = vector.shape_cast %6 : vector<16x8x32xbf16> to vector<128x32xbf16>
    %c0_3 = arith.constant 0 : index
    %c0_4 = arith.constant 0 : index
    %8 = vector.load %arg2[%c0_3, %c0_4] : memref<32x16xbf16, #tpu.memory_space<vmem>>, vector<32x16xbf16>
    %cst = arith.constant dense<0.000000e+00> : vector<128x16xf32>
    %9 = tpu.matmul %7, %8, %cst {dimension_numbers = #tpu.dot_dimension_numbers<[1], [0], [0], [1], [0, 0, 1, 1], [], []>} : vector<128x32xbf16>, vector<32x16xbf16>, vector<128x16xf32> -> vector<128x16xf32>
    %c0_5 = arith.constant 0 : index
    %c0_6 = arith.constant 0 : index
    %10 = vector.load %arg3[%c0_5, %c0_6] : memref<1x16xf32, #tpu.memory_space<vmem>>, vector<1x16xf32>
    %11 = vector.broadcast %10 : vector<1x16xf32> to vector<128x16xf32>
    %12 = arith.addf %9, %11 : vector<128x16xf32>
    %13 = vector.shape_cast %12 : vector<128x16xf32> to vector<16x8x16xf32>
    %c0_7 = arith.constant 0 : index
    %c0_8 = arith.constant 0 : index
    %c0_9 = arith.constant 0 : index
    %14 = vector.load %arg4[%c0_7, %c0_8, %c0_9] : memref<16x8x16xf32, #tpu.memory_space<vmem>>, vector<16x8x16xf32>
    tpu.vector_store %arg4[%c0_7, %c0_8, %c0_9], %13 {strides = array<i32>} : memref<16x8x16xf32, #tpu.memory_space<vmem>>, vector<16x8x16xf32>,
    return
  }
  func.func @transform_0(%arg0: i32) -> (i32, i32, i32, i32) {
    %c0_i32 = arith.constant 0 : i32
    %c0_i32_0 = arith.constant 0 : i32
    %c0_i32_1 = arith.constant 0 : i32
    %c0_i32_2 = arith.constant 0 : i32
    return %arg0, %c0_i32, %c0_i32_0, %c0_i32_1 : i32, i32, i32, i32
  }
  func.func @transform_1(%arg0: i32) -> (i32, i32) {
    %c0_i32 = arith.constant 0 : i32
    %c0_i32_0 = arith.constant 0 : i32
    %c0_i32_1 = arith.constant 0 : i32
    return %c0_i32, %c0_i32_0 : i32, i32
  }
  func.func @transform_2(%arg0: i32) -> (i32, i32) {
    %c0_i32 = arith.constant 0 : i32
    %c0_i32_0 = arith.constant 0 : i32
    %c0_i32_1 = arith.constant 0 : i32
    return %c0_i32, %c0_i32_0 : i32, i32
  }
  func.func @transform_3(%arg0: i32) -> (i32, i32, i32) {
    %c0_i32 = arith.constant 0 : i32
    %c0_i32_0 = arith.constant 0 : i32
    %c0_i32_1 = arith.constant 0 : i32
    return %arg0, %c0_i32, %c0_i32_0 : i32, i32, i32
  }
}

</mosaic_0001>

<llo_original>
// kernel: tpu_custom_call.1
$region0: #{tpu_custom_call.1}
  #allocation0 [shape = 'u32[]', space=smem, size = 0x4, offset = 0x4, fixed_abs, tag = 'smem constant byte address 0x4 - core index']
  #allocation1 [shape = 'u32[72,128]{1,0:T(1,128)}', space=vmem, size = 0x9000, scoped, tag = 'internal scratch']
  %s0 = inlined_call_operand.hbm [shape: f32[16,128], index: 0, kind: input, shape index: {}]
  %s1 = inlined_call_operand.hbm [shape: f32[8,128], index: 1, kind: input, shape index: {}]
  %s2 = inlined_call_operand.hbm [shape: f32[16,128], index: 2, kind: output, shape index: {}]
  %s3 = sld [smem:[#allocation0]]
  $region49: #{tpu_custom_call.1} parent=0
    _
  %s5 = ssub.s32 1, %s3
  %s6 = scalar_select 0, %s5, %s3
  $region1: #{tpu_custom_call.1} parent=0
    #allocation2 [shape = 'u8[8192]{0}', space=vmem, size = 0x2000, scoped, tag = 'input window, operand 0']
    #allocation3 [shape = 's32[2]{0}', space=sflag, size = 0x8, scoped, tag = 'scoped memory for tpu_custom_call.1']
    #allocation4 [shape = 's32[2]{0}', space=sflag, size = 0x8, scoped, tag = 'scoped memory for tpu_custom_call.1']
    #allocation5 [shape = 'u8[4096]{0}', space=vmem, size = 0x1000, scoped, tag = 'input window, operand 1, single buffered']
    #allocation6 [shape = 's32[1]{0}', space=sflag, size = 0x4, scoped, tag = 'scoped memory for tpu_custom_call.1']
    #allocation7 [shape = 'u8[8192]{0}', space=vmem, size = 0x2000, scoped, tag = 'output window, operand 0']
    %7 = vsyncpa [#allocation3], 0
    %s8 = scalar_lea.sflag [#allocation3], 1
    %9 = vsyncpa %s8, 0
    %10 = vsyncpa [#allocation6], 0
    %11 = vsyncpa [#allocation4], 0
    %s12 = scalar_lea.sflag [#allocation4], 1
    %13 = vsyncpa %s12, 0
    loop: start=0, step=1, limit=4
    $region2: #{tpu_custom_call.1} parent=1 // loop_pre_header
      _
    $region3: #{tpu_custom_call.1} parent=1 // loop_header
      %s15 = sphi 0, %s19
      %p16 = scmp.ge.s32.totalorder %s15, 4
      %s25 = sphi 0, %s27
      %s28 = sphi 0, %s25
      %s29 = sphi 0, %s28
      %s45 = sphi 0, %s29
      %s49 = sphi 0, %s49
      %s51 = sphi 0, %s49
      %s52 = sphi 0, %s51
      %s66 = sphi 0, %s52
      %s72 = sphi 0, %s74
      %s75 = sphi 0, %s72
      %s76 = sphi 0, %s75
      %s92 = sphi 0, %s76
    $region4: #{tpu_custom_call.1} parent=1 // loop_header_branch
      %18 = sbr.rel (%p16) target = $region8
    $region5: #{tpu_custom_call.1} parent=1 // loop_body
      %s20 = ssub.s32 %s15, 1
      %s21 = ssub.s32 %s15, 2
      %s22 = sadd.s32 %s15, 1
      %s23 = ssub.s32 %s15, %s22
      %p24 = scmp.eq.s32.totalorder %s23, 0
      %s26 = sadd.s32 %s25, 1
      %s27 = scalar_select %p24, %s25, %s26
      %p30 = pneg %p24
      %p31 = scmp.eq.s32.totalorder %s15, 1
      %p32 = por %p30, %p31
      %p33 = scmp.ne.s32.totalorder %s25, %s28
      %p34 = scmp.eq.s32.totalorder %s15, 0
      %p35 = por %p33, %p34
      %p36 = scmp.ne.s32.totalorder %s25, %s28
      %p37 = scmp.eq.s32.totalorder %s20, 1
      %p38 = por %p36, %p37
      %p39 = scmp.ne.s32.totalorder %s28, %s29
      %p40 = scmp.eq.s32.totalorder %s20, 0
      %p41 = por %p39, %p40
      %p42 = scmp.ne.s32.totalorder %s28, %s29
      %p43 = scmp.eq.s32.totalorder %s21, 1
      %p44 = por %p42, %p43
      %p46 = scmp.ne.s32.totalorder %s29, %s45
      %p47 = scmp.eq.s32.totalorder %s21, 0
      %p48 = por %p46, %p47
      %s50 = sadd.s32 %s49, 1
      %p53 = scmp.eq.s32.totalorder %s15, 1
      %p54 = scmp.ne.s32.totalorder %s49, %s51
      %p55 = scmp.eq.s32.totalorder %s15, 0
      %p56 = por %p54, %p55
      %p57 = scmp.ne.s32.totalorder %s49, %s51
      %p58 = scmp.eq.s32.totalorder %s20, 1
      %p59 = por %p57, %p58
      %p60 = scmp.ne.s32.totalorder %s51, %s52
      %p61 = scmp.eq.s32.totalorder %s20, 0
      %p62 = por %p60, %p61
      %p63 = scmp.ne.s32.totalorder %s51, %s52
      %p64 = scmp.eq.s32.totalorder %s21, 1
      %p65 = por %p63, %p64
      %p67 = scmp.ne.s32.totalorder %s52, %s66
      %p68 = scmp.eq.s32.totalorder %s21, 0
      %p69 = por %p67, %p68
      %s70 = ssub.s32 %s15, %s22
      %p71 = scmp.eq.s32.totalorder %s70, 0
      %s73 = sadd.s32 %s72, 1
      %s74 = scalar_select %p71, %s72, %s73
      %p77 = pneg %p71
      %p78 = scmp.eq.s32.totalorder %s15, 1
      %p79 = por %p77, %p78
      %p80 = scmp.ne.s32.totalorder %s72, %s75
      %p81 = scmp.eq.s32.totalorder %s15, 0
      %p82 = por %p80, %p81
      %p83 = scmp.ne.s32.totalorder %s72, %s75
      %p84 = scmp.eq.s32.totalorder %s20, 1
      %p85 = por %p83, %p84
      %p86 = scmp.ne.s32.totalorder %s75, %s76
      %p87 = scmp.eq.s32.totalorder %s20, 0
      %p88 = por %p86, %p87
      %p89 = scmp.ne.s32.totalorder %s75, %s76
      %p90 = scmp.eq.s32.totalorder %s21, 1
      %p91 = por %p89, %p90
      %p93 = scmp.ne.s32.totalorder %s76, %s92
      %p94 = scmp.eq.s32.totalorder %s21, 0
      %p95 = por %p93, %p94
      %p96 = scmp.le.s32.totalorder 1, %s15
      %p97 = scmp.lt.s32.totalorder %s15, 3
      %p98 = pnand %p96, %p97
      %p99 = pneg %p98
      // Predicated region
      $region9: #{tpu_custom_call.1} parent=5 // pred_check
        _
      $region10: #{tpu_custom_call.1} parent=5 // pred_check_branch
        %101 = sbr.rel (%p98) target = $region12
      $region11: #{tpu_custom_call.1} parent=5 // pred_region
        %s102 = ssub.s32 %s15, 1
        // Predicated region
        $region13: #{tpu_custom_call.1} parent=11 // pred_check
          %p103 = pneg %p62
        $region14: #{tpu_custom_call.1} parent=11 // pred_check_branch
          %105 = sbr.rel (%p103) target = $region16
        $region15: #{tpu_custom_call.1} parent=11 // pred_region
          %107 = vsyncadd [#allocation6], 0
          %s109 = sshll.u32 %s1, 4
          %s110 = int_to_ptr.hbm [resolvable:$true] %s109
          %s111 = sshll.u32 [#allocation5], 4
          %s112 = int_to_ptr.vmem [resolvable:$true] %s111
          %114 = dma.hbm_to_vmem [thread:$0]  %s110, 128, %s112, [#allocation6]
        $region16: #{tpu_custom_call.1} parent=11 // pred_fallthru
          _
      $region12: #{tpu_custom_call.1} parent=5 // pred_fallthru
        _
      %p115 = scmp.lt.s32.totalorder %s15, 2
      // Predicated region
      $region17: #{tpu_custom_call.1} parent=5 // pred_check
        %p116 = pneg %p115
      $region18: #{tpu_custom_call.1} parent=5 // pred_check_branch
        %118 = sbr.rel (%p116) target = $region20
      $region19: #{tpu_custom_call.1} parent=5 // pred_region
        // Predicated region
        $region21: #{tpu_custom_call.1} parent=19 // pred_check
          %p119 = pneg %p35
        $region22: #{tpu_custom_call.1} parent=19 // pred_check_branch
          %121 = sbr.rel (%p119) target = $region24
        $region23: #{tpu_custom_call.1} parent=19 // pred_region
          %s122 = sand.u32 %s25, 1
          %s123 = scalar_lea.sflag [#allocation3], %s122
          %s124 = sand.u32 %s25, 1
          %s125 = smul.addr %s124, 8
          %s126 = scalar_lea.vmem [#allocation2], %s125
          %128 = vsyncadd %s123, 0
          %s129 = smul.addr %s15, 8
          %s130 = scalar_lea.hbm %s0, %s129
          %s132 = sshll.u32 %s130, 4
          %s133 = int_to_ptr.hbm [resolvable:$true] %s132
          %s134 = sshll.u32 %s126, 4
          %s135 = int_to_ptr.vmem [resolvable:$true] %s134
          %137 = dma.hbm_to_vmem [thread:$0]  %s133, 128, %s135, %s123
        $region24: #{tpu_custom_call.1} parent=19 // pred_fallthru
          _
      $region20: #{tpu_custom_call.1} parent=5 // pred_fallthru
        _
      %p138 = scmp.le.s32.totalorder 1, %s15
      %p139 = scmp.lt.s32.totalorder %s15, 3
      %p140 = pnand %p138, %p139
      %p141 = pneg %p140
      // Predicated region
      $region25: #{tpu_custom_call.1} parent=5 // pred_check
        _
      $region26: #{tpu_custom_call.1} parent=5 // pred_check_branch
        %143 = sbr.rel (%p140) target = $region28
      $region27: #{tpu_custom_call.1} parent=5 // pred_region
        %s144 = ssub.s32 %s15, 1
        %s145 = sand.u32 %s28, 1
        %s146 = scalar_lea.sflag [#allocation3], %s145
        %s147 = sand.u32 %s28, 1
        %s148 = smul.addr %s147, 8
        %s149 = scalar_lea.vmem [#allocation2], %s148
        // Predicated region
        $region29: #{tpu_custom_call.1} parent=27 // pred_check
          %p150 = pneg %p41
        $region30: #{tpu_custom_call.1} parent=27 // pred_check_branch
          %152 = sbr.rel (%p150) target = $region32
        $region31: #{tpu_custom_call.1} parent=27 // pred_region
          %154 = dma.done %s146, 128
        $region32: #{tpu_custom_call.1} parent=27 // pred_fallthru
          _
        // Predicated region
        $region33: #{tpu_custom_call.1} parent=27 // pred_check
          %p155 = pneg %p62
        $region34: #{tpu_custom_call.1} parent=27 // pred_check_branch
          %157 = sbr.rel (%p155) target = $region36
        $region35: #{tpu_custom_call.1} parent=27 // pred_region
          %159 = dma.done [#allocation6], 128
        $region36: #{tpu_custom_call.1} parent=27 // pred_fallthru
          _
        %s160 = sand.u32 %s28, 1
        %s161 = scalar_lea.sflag [#allocation3], %s160
        %s162 = sand.u32 %s28, 1
        %s163 = smul.addr %s162, 8
        %s164 = scalar_lea.vmem [#allocation2], %s163
        %p165 = pneg %p41
        %p166 = pneg %p38
        %p167 = pneg %p62
        %p168 = pneg %p59
        %p169 = pneg %p88
        %p170 = pneg %p85
        %s171 = sand.u32 %s75, 1
        %s172 = scalar_lea.sflag [#allocation4], %s171
        %s173 = sand.u32 %s75, 1
        %s174 = smul.addr %s173, 8
        %s175 = scalar_lea.vmem [#allocation7], %s174
        %v176 = vld [vmem:[%s149] sm:$0xff]
        %v177 = vld [vmem:[#allocation5] sm:$0xff]
        %v178 = vadd.f32 %v176, %v177
        %179 = vst [vmem:[%s175] sm:$0xff] %v178
        %s180 = sand.u32 %s75, 1
        %s181 = scalar_lea.sflag [#allocation4], %s180
        %s182 = sand.u32 %s75, 1
        %s183 = smul.addr %s182, 8
        %s184 = scalar_lea.vmem [#allocation7], %s183
        // Predicated region
        $region37: #{tpu_custom_call.1} parent=27 // pred_check
          %p185 = pneg %p85
        $region38: #{tpu_custom_call.1} parent=27 // pred_check_branch
          %187 = sbr.rel (%p185) target = $region40
        $region39: #{tpu_custom_call.1} parent=27 // pred_region
          %189 = vsyncadd %s181, 0
          %s190 = smul.addr %s20, 8
          %s191 = scalar_lea.hbm %s2, %s190
          %s193 = sshll.u32 %s184, 4
          %s194 = int_to_ptr.vmem [resolvable:$true] %s193
          %s195 = sshll.u32 %s191, 4
          %s196 = int_to_ptr.hbm [resolvable:$true] %s195
          %198 = dma.vmem_to_hbm [thread:$0]  %s194, 128, %s196, %s181
        $region40: #{tpu_custom_call.1} parent=27 // pred_fallthru
          _
      $region28: #{tpu_custom_call.1} parent=5 // pred_fallthru
        _
      %p199 = scmp.le.s32.totalorder 2, %s15
      // Predicated region
      $region41: #{tpu_custom_call.1} parent=5 // pred_check
        %p200 = pneg %p199
      $region42: #{tpu_custom_call.1} parent=5 // pred_check_branch
        %202 = sbr.rel (%p200) target = $region44
      $region43: #{tpu_custom_call.1} parent=5 // pred_region
        %s203 = ssub.s32 %s15, 2
        // Predicated region
        $region45: #{tpu_custom_call.1} parent=43 // pred_check
          %p204 = pneg %p91
        $region46: #{tpu_custom_call.1} parent=43 // pred_check_branch
          %206 = sbr.rel (%p204) target = $region48
        $region47: #{tpu_custom_call.1} parent=43 // pred_region
          %s207 = sand.u32 %s76, 1
          %s208 = scalar_lea.sflag [#allocation4], %s207
          %s209 = sand.u32 %s76, 1
          %s210 = smul.addr %s209, 8
          %s211 = scalar_lea.vmem [#allocation7], %s210
          %213 = dma.done %s208, 128
        $region48: #{tpu_custom_call.1} parent=43 // pred_fallthru
          _
      $region44: #{tpu_custom_call.1} parent=5 // pred_fallthru
        _
    $region6: #{tpu_custom_call.1} parent=1 // loop_footer
      %s19 = sadd.s32 1, %s15
    $region7: #{tpu_custom_call.1} parent=1 // loop_footer_branch
      %14 = sbr.rel target = $region3
    $region8: #{tpu_custom_call.1} parent=1 // loop_exit
      _
    %214 = vsyncpa [#allocation3], 1
    %s215 = scalar_lea.sflag [#allocation3], 1
    %216 = vsyncpa %s215, 1
    %217 = vsyncpa [#allocation6], 1
    %218 = vsyncpa [#allocation4], 1
    %s219 = scalar_lea.sflag [#allocation4], 1
    %220 = vsyncpa %s219, 1

// kernel: tpu_custom_call.1
$region0: #{tpu_custom_call.1}
  #allocation0 [shape = 'u32[]', space=smem, size = 0x4, offset = 0x4, fixed_abs, tag = 'smem constant byte address 0x4 - core index']
  #allocation1 [shape = 'u32[72,128]{1,0:T(1,128)}', space=vmem, size = 0x9000, scoped, tag = 'internal scratch']
  %s0 = inlined_call_operand.hbm [shape: f32[16,2,8,16], index: 0, kind: input, shape index: {}]
  %s1 = inlined_call_operand.vmem [shape: bf16[32,16], index: 1, kind: input, shape index: {}]
  %s2 = inlined_call_operand.vmem [shape: f32[1,16], index: 2, kind: input, shape index: {}]
  %s3 = inlined_call_operand.hbm [shape: f32[16,8,16], index: 3, kind: output, shape index: {}]
  %s4 = sld [smem:[#allocation0]]
  $region26: #{tpu_custom_call.1} parent=0
    _
  %s6 = ssub.s32 1, %s4
  %s7 = scalar_select 0, %s6, %s4
  $region1: #{tpu_custom_call.1} parent=0
    #allocation2 [shape = 'u8[131072]{0}', space=vmem, size = 0x20000, scoped, tag = 'input window, operand 0, single buffered']
    #allocation3 [shape = 's32[1]{0}', space=sflag, size = 0x4, scoped, tag = 'scoped memory for tpu_custom_call.1']
    #allocation4 [shape = 's32[1]{0}', space=sflag, size = 0x4, scoped, tag = 'scoped memory for tpu_custom_call.1']
    #allocation5 [shape = 'u8[65536]{0}', space=vmem, size = 0x10000, scoped, tag = 'output window, operand 0, single buffered']
    %8 = vsyncpa [#allocation3], 0
    %9 = vsyncpa [#allocation4], 0
    // Predicated region
    $region2: #{tpu_custom_call.1} parent=1 // pred_check
      _
    $region3: #{tpu_custom_call.1} parent=1 // pred_check_branch
      %11 = sbr.rel (0) target = $region5
    $region4: #{tpu_custom_call.1} parent=1 // pred_region
      %13 = vsyncadd [#allocation3], 0
      %s14 = sshll.u32 %s0, 4
      %s15 = int_to_ptr.hbm [resolvable:$true] %s14
      %s16 = sshll.u32 [#allocation2], 4
      %s17 = int_to_ptr.vmem [resolvable:$true] %s16
      %22 = dma.hbm_to_vmem [thread:$0]  %s15, 4096, %s17, [#allocation3], 128, 128, 8
    $region5: #{tpu_custom_call.1} parent=1 // pred_fallthru
      _
    // Predicated region
    $region6: #{tpu_custom_call.1} parent=1 // pred_check
      _
    $region7: #{tpu_custom_call.1} parent=1 // pred_check_branch
      %24 = sbr.rel (0) target = $region9
    $region8: #{tpu_custom_call.1} parent=1 // pred_region
      _
    $region9: #{tpu_custom_call.1} parent=1 // pred_fallthru
      _
    // Predicated region
    $region10: #{tpu_custom_call.1} parent=1 // pred_check
      _
    $region11: #{tpu_custom_call.1} parent=1 // pred_check_branch
      %26 = sbr.rel (0) target = $region13
    $region12: #{tpu_custom_call.1} parent=1 // pred_region
      _
    $region13: #{tpu_custom_call.1} parent=1 // pred_fallthru
      _
    // Predicated region
    $region14: #{tpu_custom_call.1} parent=1 // pred_check
      _
    $region15: #{tpu_custom_call.1} parent=1 // pred_check_branch
      %28 = sbr.rel (0) target = $region17
    $region16: #{tpu_custom_call.1} parent=1 // pred_region
      %30 = dma.done [#allocation3], 4096
    $region17: #{tpu_custom_call.1} parent=1 // pred_fallthru
      _
    %v32 = vld [vmem:[#allocation2] sm:$0xff]
    %v33 = vld [vmem:[#allocation2 + $0x8] sm:$0xff]
    %v34 = vld [vmem:[#allocation2 + $0x10] sm:$0xff]
    %v35 = vld [vmem:[#allocation2 + $0x18] sm:$0xff]
    %v36 = vld [vmem:[#allocation2 + $0x20] sm:$0xff]
    %v37 = vld [vmem:[#allocation2 + $0x28] sm:$0xff]
    %v38 = vld [vmem:[#allocation2 + $0x30] sm:$0xff]
    %v39 = vld [vmem:[#allocation2 + $0x38] sm:$0xff]
    %v40 = vld [vmem:[#allocation2 + $0x40] sm:$0xff]
    %v41 = vld [vmem:[#allocation2 + $0x48] sm:$0xff]
    %v42 = vld [vmem:[#allocation2 + $0x50] sm:$0xff]
    %v43 = vld [vmem:[#allocation2 + $0x58] sm:$0xff]
    %v44 = vld [vmem:[#allocation2 + $0x60] sm:$0xff]
    %v45 = vld [vmem:[#allocation2 + $0x68] sm:$0xff]
    %v46 = vld [vmem:[#allocation2 + $0x70] sm:$0xff]
    %v47 = vld [vmem:[#allocation2 + $0x78] sm:$0xff]
    %v48 = vld [vmem:[#allocation2 + $0x80] sm:$0xff]
    %v49 = vld [vmem:[#allocation2 + $0x88] sm:$0xff]
    %v50 = vld [vmem:[#allocation2 + $0x90] sm:$0xff]
    %v51 = vld [vmem:[#allocation2 + $0x98] sm:$0xff]
    %v52 = vld [vmem:[#allocation2 + $0xa0] sm:$0xff]
    %v53 = vld [vmem:[#allocation2 + $0xa8] sm:$0xff]
    %v54 = vld [vmem:[#allocation2 + $0xb0] sm:$0xff]
    %v55 = vld [vmem:[#allocation2 + $0xb8] sm:$0xff]
    %v56 = vld [vmem:[#allocation2 + $0xc0] sm:$0xff]
    %v57 = vld [vmem:[#allocation2 + $0xc8] sm:$0xff]
    %v58 = vld [vmem:[#allocation2 + $0xd0] sm:$0xff]
    %v59 = vld [vmem:[#allocation2 + $0xd8] sm:$0xff]
    %v60 = vld [vmem:[#allocation2 + $0xe0] sm:$0xff]
    %v61 = vld [vmem:[#allocation2 + $0xe8] sm:$0xff]
    %v62 = vld [vmem:[#allocation2 + $0xf0] sm:$0xff]
    %v63 = vld [vmem:[#allocation2 + $0xf8] sm:$0xff]
    %80 = vrot.lane.b32.xlu0 %v33, 16
    %v81 = vpop.permute.xlu0 %80
    %82 = vrot.lane.b32.xlu0 %v35, 16
    %v83 = vpop.permute.xlu0 %82
    %84 = vrot.lane.b32.xlu0 %v37, 16
    %v85 = vpop.permute.xlu0 %84
    %86 = vrot.lane.b32.xlu0 %v39, 16
    %v87 = vpop.permute.xlu0 %86
    %88 = vrot.lane.b32.xlu0 %v41, 16
    %v89 = vpop.permute.xlu0 %88
    %90 = vrot.lane.b32.xlu0 %v43, 16
    %v91 = vpop.permute.xlu0 %90
    %92 = vrot.lane.b32.xlu0 %v45, 16
    %v93 = vpop.permute.xlu0 %92
    %94 = vrot.lane.b32.xlu0 %v47, 16
    %v95 = vpop.permute.xlu0 %94
    %96 = vrot.lane.b32.xlu0 %v49, 16
    %v97 = vpop.permute.xlu0 %96
    %98 = vrot.lane.b32.xlu0 %v51, 16
    %v99 = vpop.permute.xlu0 %98
    %100 = vrot.lane.b32.xlu0 %v53, 16
    %v101 = vpop.permute.xlu0 %100
    %102 = vrot.lane.b32.xlu0 %v55, 16
    %v103 = vpop.permute.xlu0 %102
    %104 = vrot.lane.b32.xlu0 %v57, 16
    %v105 = vpop.permute.xlu0 %104
    %106 = vrot.lane.b32.xlu0 %v59, 16
    %v107 = vpop.permute.xlu0 %106
    %108 = vrot.lane.b32.xlu0 %v61, 16
    %v109 = vpop.permute.xlu0 %108
    %110 = vrot.lane.b32.xlu0 %v63, 16
    %v111 = vpop.permute.xlu0 %110
    %vm128 = vcmask 130048
    %v129 = vsel %vm128, %v32, %v81
    %v130 = vsel %vm128, %v34, %v83
    %v131 = vsel %vm128, %v36, %v85
    %v132 = vsel %vm128, %v38, %v87
    %v133 = vsel %vm128, %v40, %v89
    %v134 = vsel %vm128, %v42, %v91
    %v135 = vsel %vm128, %v44, %v93
    %v136 = vsel %vm128, %v46, %v95
    %v137 = vsel %vm128, %v48, %v97
    %v138 = vsel %vm128, %v50, %v99
    %v139 = vsel %vm128, %v52, %v101
    %v140 = vsel %vm128, %v54, %v103
    %v141 = vsel %vm128, %v56, %v105
    %v142 = vsel %vm128, %v58, %v107
    %v143 = vsel %vm128, %v60, %v109
    %v144 = vsel %vm128, %v62, %v111
    %v145 = vpack.c.bf16 %v129, %v129
    %v146 = vpack.c.bf16 %v130, %v130
    %v147 = vpack.c.bf16 %v131, %v131
    %v148 = vpack.c.bf16 %v132, %v132
    %v149 = vpack.c.bf16 %v133, %v133
    %v150 = vpack.c.bf16 %v134, %v134
    %v151 = vpack.c.bf16 %v135, %v135
    %v152 = vpack.c.bf16 %v136, %v136
    %v153 = vpack.c.bf16 %v137, %v137
    %v154 = vpack.c.bf16 %v138, %v138
    %v155 = vpack.c.bf16 %v139, %v139
    %v156 = vpack.c.bf16 %v140, %v140
    %v157 = vpack.c.bf16 %v141, %v141
    %v158 = vpack.c.bf16 %v142, %v142
    %v159 = vpack.c.bf16 %v143, %v143
    %v160 = vpack.c.bf16 %v144, %v144
    %v161 = vld [vmem:[%s1] sm:$0xf]
    %v162 = vld [vmem:[%s1 + $0x4] sm:$0xf]
    %v163 = vld [vmem:[%s1 + $0x8] sm:$0xf]
    %v164 = vld [vmem:[%s1 + $0xc] sm:$0xf]
    %v165 = vld [vmem:[%s2] sm:$0x1]
    %v167 = vperm.slane %v165, 0
    %v185 = vunpack.c.l.b16 %v145
    %v186 = vunpack.c.l.b16 %v146
    %v187 = vunpack.c.l.b16 %v147
    %v188 = vunpack.c.l.b16 %v148
    %v189 = vunpack.c.l.b16 %v149
    %v190 = vunpack.c.l.b16 %v150
    %v191 = vunpack.c.l.b16 %v151
    %v192 = vunpack.c.l.b16 %v152
    %v193 = vunpack.c.l.b16 %v153
    %v194 = vunpack.c.l.b16 %v154
    %v195 = vunpack.c.l.b16 %v155
    %v196 = vunpack.c.l.b16 %v156
    %v197 = vunpack.c.l.b16 %v157
    %v198 = vunpack.c.l.b16 %v158
    %v199 = vunpack.c.l.b16 %v159
    %v200 = vunpack.c.l.b16 %v160
    %v201 = vpack.c.b16 %v186, %v185
    %v202 = vpack.c.b16 %v188, %v187
    %v203 = vpack.c.b16 %v190, %v189
    %v204 = vpack.c.b16 %v192, %v191
    %v205 = vpack.c.b16 %v194, %v193
    %v206 = vpack.c.b16 %v196, %v195
    %v207 = vpack.c.b16 %v198, %v197
    %v208 = vpack.c.b16 %v200, %v199
    %v213 = vunpack.c.l.b16 %v161
    %v214 = vunpack.c.l.b16 %v162
    %v215 = vunpack.c.l.b16 %v163
    %v216 = vunpack.c.l.b16 %v164
    %v217 = vpack.c.b16 %v214, %v213
    %v218 = vpack.c.b16 %v216, %v215
    %vm221 = vcmask 261120
    %v223 = vsel %vm221, %v201, 0
    %v226 = vsel %vm221, %v202, 0
    %v229 = vsel %vm221, %v203, 0
    %v232 = vsel %vm221, %v204, 0
    %v235 = vsel %vm221, %v205, 0
    %v238 = vsel %vm221, %v206, 0
    %v241 = vsel %vm221, %v207, 0
    %v244 = vsel %vm221, %v208, 0
    %246 = vmatpush.bf16.msra.mxu0 0
    %247 = vmatpush.bf16.msra.mxu0 0
    %248 = vmatpush.bf16.msra.mxu0 0
    %249 = vmatpush.bf16.msra.mxu0 0
    %250 = vmatpush.bf16.msra.mxu0 0
    %251 = vmatpush.bf16.msra.mxu0 0
    %252 = vmatpush.bf16.msra.mxu0 %v218
    %253 = vmatpush.bf16.msra.mxu0 %v217
    %254 = vmatmul.bf16.gmra.mxu0 %v223
    %v255 = vpop.f32.mrf.mxu0
    %v256 = vadd.f32 %v167, %v255
    %v257 = vpop.f32.mrf.mxu0
    %v258 = vadd.f32 %v167, %v257
    %259 = vmatmul.bf16.gmra.mxu0 %v226
    %v260 = vpop.f32.mrf.mxu0
    %v261 = vadd.f32 %v167, %v260
    %v262 = vpop.f32.mrf.mxu0
    %v263 = vadd.f32 %v167, %v262
    %264 = vmatmul.bf16.gmra.mxu0 %v229
    %v265 = vpop.f32.mrf.mxu0
    %v266 = vadd.f32 %v167, %v265
    %v267 = vpop.f32.mrf.mxu0
    %v268 = vadd.f32 %v167, %v267
    %269 = vmatmul.bf16.gmra.mxu0 %v232
    %v270 = vpop.f32.mrf.mxu0
    %v271 = vadd.f32 %v167, %v270
    %v272 = vpop.f32.mrf.mxu0
    %v273 = vadd.f32 %v167, %v272
    %274 = vmatmul.bf16.gmra.mxu0 %v235
    %v275 = vpop.f32.mrf.mxu0
    %v276 = vadd.f32 %v167, %v275
    %v277 = vpop.f32.mrf.mxu0
    %v278 = vadd.f32 %v167, %v277
    %279 = vmatmul.bf16.gmra.mxu0 %v238
    %v280 = vpop.f32.mrf.mxu0
    %v281 = vadd.f32 %v167, %v280
    %v282 = vpop.f32.mrf.mxu0
    %v283 = vadd.f32 %v167, %v282
    %284 = vmatmul.bf16.gmra.mxu0 %v241
    %v285 = vpop.f32.mrf.mxu0
    %v286 = vadd.f32 %v167, %v285
    %v287 = vpop.f32.mrf.mxu0
    %v288 = vadd.f32 %v167, %v287
    %289 = vmatmul.bf16.gmra.mxu0 %v244
    %v290 = vpop.f32.mrf.mxu0
    %v291 = vadd.f32 %v167, %v290
    %v292 = vpop.f32.mrf.mxu0
    %v293 = vadd.f32 %v167, %v292
    %294 = vdwg.mxu0
    %295 = vst.msk [vmem:[#allocation5] sm:$0xff] %vm128, %v256
    %296 = vst.msk [vmem:[#allocation5 + $0x8] sm:$0xff] %vm128, %v258
    %297 = vst.msk [vmem:[#allocation5 + $0x10] sm:$0xff] %vm128, %v261
    %298 = vst.msk [vmem:[#allocation5 + $0x18] sm:$0xff] %vm128, %v263
    %299 = vst.msk [vmem:[#allocation5 + $0x20] sm:$0xff] %vm128, %v266
    %300 = vst.msk [vmem:[#allocation5 + $0x28] sm:$0xff] %vm128, %v268
    %301 = vst.msk [vmem:[#allocation5 + $0x30] sm:$0xff] %vm128, %v271
    %302 = vst.msk [vmem:[#allocation5 + $0x38] sm:$0xff] %vm128, %v273
    %303 = vst.msk [vmem:[#allocation5 + $0x40] sm:$0xff] %vm128, %v276
    %304 = vst.msk [vmem:[#allocation5 + $0x48] sm:$0xff] %vm128, %v278
    %305 = vst.msk [vmem:[#allocation5 + $0x50] sm:$0xff] %vm128, %v281
    %306 = vst.msk [vmem:[#allocation5 + $0x58] sm:$0xff] %vm128, %v283
    %307 = vst.msk [vmem:[#allocation5 + $0x60] sm:$0xff] %vm128, %v286
    %308 = vst.msk [vmem:[#allocation5 + $0x68] sm:$0xff] %vm128, %v288
    %309 = vst.msk [vmem:[#allocation5 + $0x70] sm:$0xff] %vm128, %v291
    %310 = vst.msk [vmem:[#allocation5 + $0x78] sm:$0xff] %vm128, %v293
    // Predicated region
    $region18: #{tpu_custom_call.1} parent=1 // pred_check
      _
    $region19: #{tpu_custom_call.1} parent=1 // pred_check_branch
      %312 = sbr.rel (0) target = $region21
    $region20: #{tpu_custom_call.1} parent=1 // pred_region
      %314 = vsyncadd [#allocation4], 0
      %s315 = sshll.u32 [#allocation5], 4
      %s316 = int_to_ptr.vmem [resolvable:$true] %s315
      %s317 = sshll.u32 %s3, 4
      %s318 = int_to_ptr.hbm [resolvable:$true] %s317
      %323 = dma.vmem_to_hbm [thread:$0]  %s316, 2048, %s318, [#allocation4], 128, 128, 8
    $region21: #{tpu_custom_call.1} parent=1 // pred_fallthru
      _
    // Predicated region
    $region22: #{tpu_custom_call.1} parent=1 // pred_check
      _
    $region23: #{tpu_custom_call.1} parent=1 // pred_check_branch
      %325 = sbr.rel (0) target = $region25
    $region24: #{tpu_custom_call.1} parent=1 // pred_region
      %327 = dma.done [#allocation4], 2048
    $region25: #{tpu_custom_call.1} parent=1 // pred_fallthru
      _
    %328 = vsyncpa [#allocation3], 1
    %329 = vsyncpa [#allocation4], 1

</llo_original>
